<compile_context>
chip_gen: v7x
topology: tpu7x:2x2x1
jax: 0.10.0
libtpu: 0.0.40
codegen_flags: <defaults>
</compile_context>

<pallas_src>
import functools

import jax
import jax.numpy as jnp
from jax import lax
from jax.experimental import pallas as pl
from jax.experimental.pallas import tpu as pltpu


def _sublayer_kernel(seed_ref, x_ref, s_ref, g_ref, b_ref, o_ref, *,
                     eps, keep_threshold, keep_scale, apply_dropout,
                     feat, block_rows):
    """Fused: out = dropout(layer_norm(x + sublayer_out))."""
    # Residual add; upcast to f32 in vregs (HBM traffic stays native dtype).
    y = x_ref[...].astype(jnp.float32) + s_ref[...].astype(jnp.float32)

    # One-pass mean / unbiased variance (torch .std(): ddof=1, eps on std).
    ssum = jnp.sum(y, axis=-1, keepdims=True)
    sqsum = jnp.sum(y * y, axis=-1, keepdims=True)
    mean = ssum * (1.0 / float(feat))
    ddof = max(feat - 1, 1)                       # guard feat == 1
    var = (sqsum - ssum * mean) * (1.0 / float(ddof))
    std = jnp.sqrt(jnp.maximum(var, 0.0))
    # Per-row scalar divide, amortized over `feat` lanes -> negligible.
    # (pl.reciprocal(approx=True) would be TPU-only; not worth the risk here.)
    inv = 1.0 / (std + eps)

    out = g_ref[...] * ((y - mean) * inv) + b_ref[...]

    if apply_dropout:
        # Counter-based hash PRNG: unique per global element index + seed.
        shape = out.shape
        rows = (lax.broadcasted_iota(jnp.int32, shape, 0)
                + pl.program_id(0) * block_rows)
        cols = lax.broadcasted_iota(jnp.int32, shape, 1)
        h = (rows * feat + cols).astype(jnp.uint32)
        h = h + seed_ref[0].astype(jnp.uint32) * jnp.uint32(0x9E3779B9)
        h = h ^ (h >> 16)
        h = h * jnp.uint32(0x21F0AAAD)
        h = h ^ (h >> 15)
        h = h * jnp.uint32(0x735A2D97)
        h = h ^ (h >> 15)
        # Integer-domain keep test (keep prob ~= 1 - p).
        keep = h >= jnp.uint32(keep_threshold)
        out = jnp.where(keep, out * keep_scale, 0.0)

    o_ref[...] = out.astype(o_ref.dtype)


def _pick_block_rows(n_rows, feat, in_itemsize, out_itemsize):
    """Row-block sized by total double-buffered VMEM footprint."""
    # Per-row bytes: 2 double-buffered inputs + 1 double-buffered output
    # + ~3 block-sized f32 temporaries (y, f32 result, PRNG bits).
    per_row = feat * (2 * in_itemsize * 2 + out_itemsize * 2 + 3 * 4)
    vmem_budget = 24 * 1024 * 1024                 # under the 32 MiB we request
    br = vmem_budget // max(1, per_row)
    # Mem-bound sweet spot: ~2-4 MiB per input block; bigger buys little and
    # would overshoot v7x's 64 MiB physical VMEM.
    br = min(br, max(8, (4 * 1024 * 1024) // max(1, feat * in_itemsize)))
    br = max(8, (br // 8) * 8)                     # sublane-aligned
    if br >= n_rows:
        return n_rows                              # full-extent block is always legal
    return br


def _fused_residual_ln_dropout(x, s, gamma, beta, *, eps, p, deterministic,
                               seed):
    orig_shape = x.shape
    feat = orig_shape[-1]
    n_rows = x.size // feat

    # Reshape only (no cast / pad / copy): (..., D) -> (rows, D); D -> lanes.
    # Note: feat that is a multiple of 128 gives lane-dense stores; the small
    # demo (D=32) runs at reduced lane utilization by construction.
    x2 = x.reshape(n_rows, feat)
    s2 = s.reshape(n_rows, feat)
    g2 = jnp.asarray(gamma, jnp.float32).reshape(1, feat)
    b2 = jnp.asarray(beta, jnp.float32).reshape(1, feat)

    p = float(p)
    apply_dropout = (not deterministic) and p > 0.0
    if apply_dropout and p >= 1.0:                 # torch Dropout(p=1) -> all zeros
        return jnp.zeros(orig_shape, x.dtype)

    br = _pick_block_rows(n_rows, feat, x.dtype.itemsize, x.dtype.itemsize)
    grid = (pl.cdiv(n_rows, br),)                  # ragged last block is clipped

    keep_threshold = min(int(round(p * 2.0 ** 32)), 2 ** 32 - 1)
    keep_scale = (1.0 / (1.0 - p)) if apply_dropout else 1.0

    kernel = functools.partial(
        _sublayer_kernel, eps=float(eps), keep_threshold=keep_threshold,
        keep_scale=keep_scale, apply_dropout=apply_dropout,
        feat=int(feat), block_rows=int(br))

    # TODO(synk): a fixed rng_seed reused across calls/layers gives correlated
    # dropout masks; callers should pass a fresh seed per call.
    seed_arr = jnp.asarray([seed], dtype=jnp.int32)

    out = pl.pallas_call(
        kernel,
        out_shape=jax.ShapeDtypeStruct((n_rows, feat), x.dtype),
        grid_spec=pltpu.PrefetchScalarGridSpec(
            num_scalar_prefetch=1,
            grid=grid,
            in_specs=[
                pl.BlockSpec((br, feat), lambda i, seed: (i, 0)),
                pl.BlockSpec((br, feat), lambda i, seed: (i, 0)),
                pl.BlockSpec((1, feat), lambda i, seed: (0, 0)),
                pl.BlockSpec((1, feat), lambda i, seed: (0, 0)),
            ],
            out_specs=pl.BlockSpec((br, feat), lambda i, seed: (i, 0)),
        ),
        compiler_params=pltpu.CompilerParams(
            dimension_semantics=("parallel",),
            vmem_limit_bytes=32 * 1024 * 1024),
    )(seed_arr, x2, s2, g2, b2)

    return out.reshape(orig_shape)


class SublayerConnectionPallas:
    """JAX/Pallas port of SublayerConnection (residual + LayerNorm + dropout)."""

    def __init__(self, size, dropout_prob, eps=1e-6):
        self.size = size
        self.p = float(dropout_prob)
        self.eps = float(eps)
        self.a_2 = jnp.ones((size,), jnp.float32)    # LayerNormalization.a_2
        self.b_2 = jnp.zeros((size,), jnp.float32)   # LayerNormalization.b_2

    def __call__(self, x, sublayer, *, deterministic=True, rng_seed=0):
        # TODO(synk): the arbitrary `sublayer` callable has no Pallas
        # equivalent; it runs as plain JAX, and only the residual add +
        # LayerNorm + dropout are fused in the Pallas kernel.
        s = sublayer(x)
        return _fused_residual_ln_dropout(
            x, s, self.a_2, self.b_2, eps=self.eps, p=self.p,
            deterministic=deterministic, seed=rng_seed)


def _reference(x, s, gamma, beta, eps):
    """Pure-JAX reference mirroring the torch module (no dropout)."""
    y = (x + s).astype(jnp.float32)
    mean = jnp.mean(y, axis=-1, keepdims=True)
    c = y - mean
    std = jnp.sqrt(jnp.sum(c * c, axis=-1, keepdims=True) / (y.shape[-1] - 1))
    return (gamma * c / (std + eps) + beta).astype(x.dtype)


if __name__ == "__main__":
    key = jax.random.PRNGKey(0)
    k1, k2 = jax.random.split(key, 2)
    B, T, D = 2, 8, 32
    x = jax.random.normal(k1, (B, T, D), dtype=jnp.float32)
    W = jax.random.normal(k2, (D, D), dtype=jnp.float32) * 0.1

    def sublayer(v):
        return jnp.tanh(v @ W)

    mod = SublayerConnectionPallas(size=D, dropout_prob=0.1)
    ref = _reference(x, sublayer(x), mod.a_2, mod.b_2, mod.eps)

    # Eval mode (dropout disabled): must match the pure-JAX reference.
    out = mod(x, sublayer, deterministic=True)
    jax.block_until_ready(out)
    assert out.shape == x.shape
    assert jnp.allclose(out, ref, rtol=1e-5, atol=1e-5), \
        float(jnp.max(jnp.abs(out - ref)))

    # Train mode (dropout active): kept values must equal ref / (1 - p),
    # dropped values are exactly zero, and roughly p of them are dropped.
    out_train = mod(x, sublayer, deterministic=False, rng_seed=123)
    jax.block_until_ready(out_train)
    assert out_train.shape == x.shape
    kept = out_train != 0
    assert jnp.allclose(jnp.where(kept, out_train, 0.0),
                        jnp.where(kept, ref / (1.0 - mod.p), 0.0),
                        rtol=1e-5, atol=1e-5)
    n_dropped = int(jnp.sum(~kept))
    assert 0 < n_dropped < x.size, n_dropped

    print("KERNEL_OK")
</pallas_src>

<mosaic_0001>
module attributes {stable_mosaic.version = 11 : i64} {
  func.func @_sublayer_kernel(%arg0: i32, %arg1: memref<1xi32, #tpu.memory_space<smem>>, %arg2: memref<16x32xf32, #tpu.memory_space<vmem>>, %arg3: memref<16x32xf32, #tpu.memory_space<vmem>>, %arg4: memref<1x32xf32, #tpu.memory_space<vmem>>, %arg5: memref<1x32xf32, #tpu.memory_space<vmem>>, %arg6: memref<16x32xf32, #tpu.memory_space<vmem>>) attributes {dimension_semantics = [#tpu.dimension_semantics<parallel>], iteration_bounds = array<i64: 1>, scalar_prefetch = 1 : i64, scratch_operands = 0 : i64, tpu.core_type = #tpu.core_type<tc>, window_params = [{transform_indices = @transform_0, window_bounds = array<i64: 16, 32>}, {transform_indices = @transform_1, window_bounds = array<i64: 16, 32>}, {pipeline_mode = #tpu.pipeline_mode<synchronous>, transform_indices = @transform_2, window_bounds = array<i64: 1, 32>}, {pipeline_mode = #tpu.pipeline_mode<synchronous>, transform_indices = @transform_3, window_bounds = array<i64: 1, 32>}, {transform_indices = @transform_4, window_bounds = array<i64: 16, 32>}]} {
    %c0 = arith.constant 0 : index
    %c0_0 = arith.constant 0 : index
    %0 = vector.load %arg2[%c0, %c0_0] : memref<16x32xf32, #tpu.memory_space<vmem>>, vector<16x32xf32>
    %c0_1 = arith.constant 0 : index
    %c0_2 = arith.constant 0 : index
    %1 = vector.load %arg3[%c0_1, %c0_2] : memref<16x32xf32, #tpu.memory_space<vmem>>, vector<16x32xf32>
    %2 = arith.addf %0, %1 : vector<16x32xf32>
    %cst = arith.constant dense<0.000000e+00> : vector<16xf32>
    %3 = vector.multi_reduction <add>, %2, %cst [1] : vector<16x32xf32> to vector<16xf32>
    %4 = vector.shape_cast %3 : vector<16xf32> to vector<16x1xf32>
    %5 = arith.mulf %2, %2 : vector<16x32xf32>
    %cst_3 = arith.constant dense<0.000000e+00> : vector<16xf32>
    %6 = vector.multi_reduction <add>, %5, %cst_3 [1] : vector<16x32xf32> to vector<16xf32>
    %7 = vector.shape_cast %6 : vector<16xf32> to vector<16x1xf32>
    %cst_4 = arith.constant 3.125000e-02 : f32
    %8 = vector.broadcast %cst_4 : f32 to vector<16x1xf32>
    %9 = arith.mulf %4, %8 : vector<16x1xf32>
    %10 = arith.mulf %4, %9 : vector<16x1xf32>
    %11 = arith.subf %7, %10 : vector<16x1xf32>
    %cst_5 = arith.constant 0.0322580636 : f32
    %12 = vector.broadcast %cst_5 : f32 to vector<16x1xf32>
    %13 = arith.mulf %11, %12 : vector<16x1xf32>
    %cst_6 = arith.constant 0.000000e+00 : f32
    %14 = vector.broadcast %cst_6 : f32 to vector<16x1xf32>
    %15 = arith.maximumf %13, %14 : vector<16x1xf32>
    %16 = math.sqrt %15 : vector<16x1xf32>
    %cst_7 = arith.constant 9.99999997E-7 : f32
    %17 = vector.broadcast %cst_7 : f32 to vector<16x1xf32>
    %18 = arith.addf %16, %17 : vector<16x1xf32>
    %cst_8 = arith.constant 1.000000e+00 : f32
    %19 = vector.broadcast %cst_8 : f32 to vector<16x1xf32>
    %20 = arith.divf %19, %18 : vector<16x1xf32>
    %c0_9 = arith.constant 0 : index
    %c0_10 = arith.constant 0 : index
    %21 = vector.load %arg4[%c0_9, %c0_10] : memref<1x32xf32, #tpu.memory_space<vmem>>, vector<1x32xf32>
    %22 = vector.broadcast %9 : vector<16x1xf32> to vector<16x32xf32>
    %23 = arith.subf %2, %22 : vector<16x32xf32>
    %24 = vector.broadcast %20 : vector<16x1xf32> to vector<16x32xf32>
    %25 = arith.mulf %23, %24 : vector<16x32xf32>
    %26 = vector.broadcast %21 : vector<1x32xf32> to vector<16x32xf32>
    %27 = arith.mulf %26, %25 : vector<16x32xf32>
    %c0_11 = arith.constant 0 : index
    %c0_12 = arith.constant 0 : index
    %28 = vector.load %arg5[%c0_11, %c0_12] : memref<1x32xf32, #tpu.memory_space<vmem>>, vector<1x32xf32>
    %29 = vector.broadcast %28 : vector<1x32xf32> to vector<16x32xf32>
    %30 = arith.addf %27, %29 : vector<16x32xf32>
    %c0_13 = arith.constant 0 : index
    %c0_14 = arith.constant 0 : index
    %31 = vector.load %arg6[%c0_13, %c0_14] : memref<16x32xf32, #tpu.memory_space<vmem>>, vector<16x32xf32>
    tpu.vector_store %arg6[%c0_13, %c0_14], %30 {strides = array<i32>} : memref<16x32xf32, #tpu.memory_space<vmem>>, vector<16x32xf32>,
    return
  }
  func.func @transform_0(%arg0: i32, %arg1: memref<1xi32, #tpu.memory_space<smem>>) -> (i32, i32) {
    %c0_i32 = arith.constant 0 : i32
    %c0_i32_0 = arith.constant 0 : i32
    return %arg0, %c0_i32 : i32, i32
  }
  func.func @transform_1(%arg0: i32, %arg1: memref<1xi32, #tpu.memory_space<smem>>) -> (i32, i32) {
    %c0_i32 = arith.constant 0 : i32
    %c0_i32_0 = arith.constant 0 : i32
    return %arg0, %c0_i32 : i32, i32
  }
  func.func @transform_2(%arg0: i32, %arg1: memref<1xi32, #tpu.memory_space<smem>>) -> (i32, i32) {
    %c0_i32 = arith.constant 0 : i32
    %c0_i32_0 = arith.constant 0 : i32
    %c0_i32_1 = arith.constant 0 : i32
    return %c0_i32, %c0_i32_0 : i32, i32
  }
  func.func @transform_3(%arg0: i32, %arg1: memref<1xi32, #tpu.memory_space<smem>>) -> (i32, i32) {
    %c0_i32 = arith.constant 0 : i32
    %c0_i32_0 = arith.constant 0 : i32
    %c0_i32_1 = arith.constant 0 : i32
    return %c0_i32, %c0_i32_0 : i32, i32
  }
  func.func @transform_4(%arg0: i32, %arg1: memref<1xi32, #tpu.memory_space<smem>>) -> (i32, i32) {
    %c0_i32 = arith.constant 0 : i32
    %c0_i32_0 = arith.constant 0 : i32
    return %arg0, %c0_i32 : i32, i32
  }
}

</mosaic_0001>

<llo_original>
// kernel: tpu_custom_call.1
$region0: #{tpu_custom_call.1}
  #allocation0 [shape = 'u32[]', space=smem, size = 0x4, offset = 0x4, fixed_abs, tag = 'smem constant byte address 0x4 - core index']
  #allocation1 [shape = 'u32[144,128]{1,0:T(1,128)}', space=vmem, size = 0x12000, scoped, tag = 'internal scratch']
  #allocation2 [shape = 's32[1]{0}', space=sflag, size = 0x4, scoped, tag = 'scoped memory for tpu_custom_call.1']
  #allocation3 [shape = 's32[1]{0:T(128)S(6)}', space=smem, size = 0x200, scoped, tag = 'prefetched SMEM operand 0']
  %s0 = inlined_call_operand.<no memory space> [shape: s32[1], index: 0, kind: input, shape index: {}]
  %s1 = inlined_call_operand.hbm [shape: f32[16,32], index: 1, kind: input, shape index: {}]
  %s2 = inlined_call_operand.hbm [shape: f32[16,32], index: 2, kind: input, shape index: {}]
  %s3 = inlined_call_operand.vmem [shape: f32[1,32], index: 3, kind: input, shape index: {}]
  %s4 = inlined_call_operand.vmem [shape: f32[1,32], index: 4, kind: input, shape index: {}]
  %s5 = inlined_call_operand.hbm [shape: f32[16,32], index: 5, kind: output, shape index: {}]
  %s6 = sld [smem:[#allocation0]]
  $region34: #{tpu_custom_call.1} parent=0
    _
  %s8 = ssub.s32 1, %s6
  %s9 = scalar_select 0, %s8, %s6
  %10 = sst [smem:[#allocation3]] %s0
  $region1: #{tpu_custom_call.1} parent=0
    #allocation4 [shape = 'u8[8192]{0}', space=vmem, size = 0x2000, scoped, tag = 'input window, operand 1, single buffered']
    #allocation5 [shape = 's32[1]{0}', space=sflag, size = 0x4, scoped, tag = 'scoped memory for tpu_custom_call.1']
    #allocation6 [shape = 's32[1]{0}', space=sflag, size = 0x4, scoped, tag = 'scoped memory for tpu_custom_call.1']
    #allocation7 [shape = 'u8[8192]{0}', space=vmem, size = 0x2000, scoped, tag = 'input window, operand 2, single buffered']
    #allocation8 [shape = 's32[1]{0}', space=sflag, size = 0x4, scoped, tag = 'scoped memory for tpu_custom_call.1']
    #allocation9 [shape = 'u8[8192]{0}', space=vmem, size = 0x2000, scoped, tag = 'output window, operand 0, single buffered']
    %11 = vsyncpa [#allocation5], 0
    %12 = vsyncpa [#allocation8], 0
    %13 = vsyncpa [#allocation6], 0
    // Predicated region
    $region2: #{tpu_custom_call.1} parent=1 // pred_check
      _
    $region3: #{tpu_custom_call.1} parent=1 // pred_check_branch
      %15 = sbr.rel (0) target = $region5
    $region4: #{tpu_custom_call.1} parent=1 // pred_region
      %s17 = ssub.s32 256, 256
      %18 = vsyncadd [#allocation5], %s17
      %s19 = sshll.u32 [#allocation4], 4
      %s20 = int_to_ptr.vmem [resolvable:$true] %s19
      %25 = dma.hbm_to_vmem [thread:$0]  %s1, 256, %s20, [#allocation5], 128, 128, 8
    $region5: #{tpu_custom_call.1} parent=1 // pred_fallthru
      _
    // Predicated region
    $region6: #{tpu_custom_call.1} parent=1 // pred_check
      _
    $region7: #{tpu_custom_call.1} parent=1 // pred_check_branch
      %27 = sbr.rel (0) target = $region9
    $region8: #{tpu_custom_call.1} parent=1 // pred_region
      %s29 = ssub.s32 256, 256
      %30 = vsyncadd [#allocation8], %s29
      %s31 = sshll.u32 [#allocation7], 4
      %s32 = int_to_ptr.vmem [resolvable:$true] %s31
      %37 = dma.hbm_to_vmem [thread:$0]  %s2, 256, %s32, [#allocation8], 128, 128, 8
    $region9: #{tpu_custom_call.1} parent=1 // pred_fallthru
      _
    // Predicated region
    $region10: #{tpu_custom_call.1} parent=1 // pred_check
      _
    $region11: #{tpu_custom_call.1} parent=1 // pred_check_branch
      %39 = sbr.rel (0) target = $region13
    $region12: #{tpu_custom_call.1} parent=1 // pred_region
      _
    $region13: #{tpu_custom_call.1} parent=1 // pred_fallthru
      _
    // Predicated region
    $region14: #{tpu_custom_call.1} parent=1 // pred_check
      _
    $region15: #{tpu_custom_call.1} parent=1 // pred_check_branch
      %41 = sbr.rel (0) target = $region17
    $region16: #{tpu_custom_call.1} parent=1 // pred_region
      _
    $region17: #{tpu_custom_call.1} parent=1 // pred_fallthru
      _
    // Predicated region
    $region18: #{tpu_custom_call.1} parent=1 // pred_check
      _
    $region19: #{tpu_custom_call.1} parent=1 // pred_check_branch
      %43 = sbr.rel (0) target = $region21
    $region20: #{tpu_custom_call.1} parent=1 // pred_region
      %44 = dma.done [#allocation5], 256
    $region21: #{tpu_custom_call.1} parent=1 // pred_fallthru
      _
    // Predicated region
    $region22: #{tpu_custom_call.1} parent=1 // pred_check
      _
    $region23: #{tpu_custom_call.1} parent=1 // pred_check_branch
      %46 = sbr.rel (0) target = $region25
    $region24: #{tpu_custom_call.1} parent=1 // pred_region
      %47 = dma.done [#allocation8], 256
    $region25: #{tpu_custom_call.1} parent=1 // pred_fallthru
      _
    %v48 = vld [vmem:[#allocation4] sm:$0xff]
    %v49 = vld [vmem:[#allocation4 + $0x8] sm:$0xff]
    %v50 = vld [vmem:[#allocation7] sm:$0xff]
    %v51 = vld [vmem:[#allocation7 + $0x8] sm:$0xff]
    %v52 = vadd.f32 %v48, %v50
    %v53 = vadd.f32 %v49, %v51
    %vm54 = vcmask 261120
    %v55 = vsel %vm54, %v52, 0.0
    %56 = vadd.xlane.f32.xlu0 %v55
    %v57 = vpop.xlane.xlu0 %56
    %v58 = vsel %vm54, %v53, 0.0
    %59 = vadd.xlane.f32.xlu0 %v58
    %v60 = vpop.xlane.xlu0 %59
    %v61 = vmul.f32 %v52, %v52
    %v62 = vmul.f32 %v53, %v53
    %v63 = vsel %vm54, %v61, 0.0
    %64 = vadd.xlane.f32.xlu0 %v63
    %v65 = vpop.xlane.xlu0 %64
    %v66 = vsel %vm54, %v62, 0.0
    %67 = vadd.xlane.f32.xlu0 %v66
    %v68 = vpop.xlane.xlu0 %67
    %v69 = vmul.f32 %v57, 0.03125
    %v70 = vmul.f32 %v60, 0.03125
    %v71 = vmul.f32 %v57, %v69
    %v72 = vmul.f32 %v60, %v70
    %v73 = vsub.f32 %v65, %v71
    %v74 = vsub.f32 %v68, %v72
    %v75 = vmul.f32 %v73, 0.032258064
    %v76 = vmul.f32 %v74, 0.032258064
    %v77 = vmax.f32 %v75, 0.0
    %v78 = vmax.f32 %v76, 0.0
    %v79 = vrsqrt.pop %v77
    %v80 = vmul.f32 %v77, %v79
    %vm81 = vcmp.eq.f32.partialorder %v77, inf
    %v82 = vsel %vm81, %v77, %v80
    %vm83 = vcmp.eq.f32.partialorder %v77, 0.0
    %v84 = vand.u32 %v77, 2147483648
    %v85 = vsel %vm83, %v84, %v82
    %v86 = vrsqrt.pop %v78
    %v87 = vmul.f32 %v78, %v86
    %vm88 = vcmp.eq.f32.partialorder %v78, inf
    %v89 = vsel %vm88, %v78, %v87
    %vm90 = vcmp.eq.f32.partialorder %v78, 0.0
    %v91 = vand.u32 %v78, 2147483648
    %v92 = vsel %vm90, %v91, %v89
    %v93 = vadd.f32 %v85, 1e-06
    %v94 = vadd.f32 %v92, 1e-06
    %v95 = vrcp.pop %v93
    %v96 = vmul.f32 1.0, %v95
    %v97 = vrcp.pop %v94
    %v98 = vmul.f32 1.0, %v97
    %v99 = vld [vmem:[%s3] sm:$0x1]
    %v100 = vsub.f32 %v52, %v69
    %v101 = vsub.f32 %v53, %v70
    %v102 = vmul.f32 %v100, %v96
    %v103 = vmul.f32 %v101, %v98
    %v105 = vlaneseq
    %v106 = vshrl.u32 %v105, 7
    %v107 = vsub.s32 0, %v106
    %v108 = vrot.slane %v99, %v107
    %v110 = vmul.f32 %v108, %v102
    %v111 = vmul.f32 %v108, %v103
    %v112 = vld [vmem:[%s4] sm:$0x1]
    %v114 = vlaneseq
    %v115 = vshrl.u32 %v114, 7
    %v116 = vsub.s32 0, %v115
    %v117 = vrot.slane %v112, %v116
    %v119 = vadd.f32 %v110, %v117
    %v120 = vadd.f32 %v111, %v117
    %121 = vst.msk [vmem:[#allocation9] sm:$0xff] %vm54, %v119
    %122 = vst.msk [vmem:[#allocation9 + $0x8] sm:$0xff] %vm54, %v120
    // Predicated region
    $region26: #{tpu_custom_call.1} parent=1 // pred_check
      _
    $region27: #{tpu_custom_call.1} parent=1 // pred_check_branch
      %124 = sbr.rel (0) target = $region29
    $region28: #{tpu_custom_call.1} parent=1 // pred_region
      %s126 = ssub.s32 256, 256
      %127 = vsyncadd [#allocation6], %s126
      %s128 = sshll.u32 [#allocation9], 4
      %s129 = int_to_ptr.vmem [resolvable:$true] %s128
      %134 = dma.vmem_to_hbm [thread:$0]  %s129, 256, %s5, [#allocation6], 128, 128, 8
    $region29: #{tpu_custom_call.1} parent=1 // pred_fallthru
      _
    // Predicated region
    $region30: #{tpu_custom_call.1} parent=1 // pred_check
      _
    $region31: #{tpu_custom_call.1} parent=1 // pred_check_branch
      %136 = sbr.rel (0) target = $region33
    $region32: #{tpu_custom_call.1} parent=1 // pred_region
      %137 = dma.done [#allocation6], 256
    $region33: #{tpu_custom_call.1} parent=1 // pred_fallthru
      _
    %138 = vsyncpa [#allocation5], 1
    %139 = vsyncpa [#allocation8], 1
    %140 = vsyncpa [#allocation6], 1

</llo_original>
